<compile_context>
chip_gen: v7x
topology: tpu7x:2x2x1
jax: 0.10.0
libtpu: 0.0.40
codegen_flags: <defaults>
</compile_context>

<pallas_src>
import functools

import jax
import jax.numpy as jnp
from jax import lax
from jax.experimental import pallas as pl
from jax.experimental.pallas import tpu as pltpu

_LANE = 128
_SUBLANE = 8


def _round_up(x, m):
    return ((x + m - 1) // m) * m


def _cdiv(a, b):
    return -(-a // b)


# ---------------------------------------------------------------------------
# Kernels
# ---------------------------------------------------------------------------
def _rhs_kernel(compute_dtype):
    """One RHS evaluation: dxdt = tanh(x@W1 + b1) @ W2s + b2s.

    scale and the gene scatter are pre-folded into W2s / b2s, so non-gene and
    padded output columns are exactly 0.0.
    """

    def kernel(x_ref, w1_ref, b1_ref, w2s_ref, b2s_ref, dxdt_ref):
        x = x_ref[...].astype(compute_dtype)                       # (TB, Np)
        h = jnp.tanh(
            jnp.dot(x, w1_ref[...], preferred_element_type=jnp.float32)
            + b1_ref[...]
        )                                                          # (TB, Hp) f32
        dxdt_ref[...] = (
            jnp.dot(h.astype(compute_dtype), w2s_ref[...],
                    preferred_element_type=jnp.float32)
            + b2s_ref[...]
        ).astype(dxdt_ref.dtype)                                   # (TB, Np)

    return kernel


def _euler_kernel(n_steps, compute_dtype):
    """Fused explicit-Euler integrator: all n_steps run inside ONE invocation.

    Grid = (batch_tiles,). The state is carried through an in-kernel
    lax.fori_loop (f32), weights are DMA'd once per batch tile, and dt*scale
    are folded into W2d/b2d so the per-step update is a single vadd.
    """
    unroll = n_steps <= 32

    def kernel(x0_ref, w1_ref, b1_ref, w2d_ref, b2d_ref, xT_ref):
        tb, np_ = x0_ref.shape
        hp = b1_ref.shape[1]
        # Weights loaded once per tile; bias broadcasts hoisted out of the step
        # loop (JAX does not CSE broadcast_in_dim inside loop bodies).
        w1 = w1_ref[...]
        w2d = w2d_ref[...]
        b1b = jnp.broadcast_to(b1_ref[...], (tb, hp))
        b2b = jnp.broadcast_to(b2d_ref[...], (tb, np_))

        def body(_, x):
            h = jnp.tanh(
                jnp.dot(x.astype(compute_dtype), w1,
                        preferred_element_type=jnp.float32) + b1b)
            dxdt = jnp.dot(h.astype(compute_dtype), w2d,
                           preferred_element_type=jnp.float32) + b2b
            return x + dxdt          # dt and scale already folded into w2d/b2d

        xT = lax.fori_loop(0, n_steps, body,
                           x0_ref[...].astype(jnp.float32), unroll=unroll)
        xT_ref[...] = xT.astype(xT_ref.dtype)

    return kernel


# ---------------------------------------------------------------------------
# Builder: all constant preparation hoisted out of the per-call path.
# ---------------------------------------------------------------------------
def make_odefunc(params, gene_ixs, n_inputs, scale=1.0, tb_max=256,
                 compute_dtype=jnp.float32):
    """Returns (forward, euler_solve).

    forward(t, x)                -> dxdt   (module forward; t unused, SWE=None)
    euler_solve(x0, dt, n_steps) -> x(T)   (fused multi-step integrator)
    """
    w1, b1, w2, b2 = params
    N = int(n_inputs)
    H = int(w1.shape[1])
    Np, Hp = _round_up(N, _LANE), _round_up(H, _LANE)
    gene_ixs = jnp.asarray(gene_ixs, jnp.int32)

    # --- built exactly once ---------------------------------------------------
    # Zero padding keeps exact semantics: padded x cols are 0, padded hidden
    # units see bias 0 -> tanh(0)=0, and non-gene / padded output columns of
    # W2s/b2s are zero, so dxdt is exactly 0.0 there.
    # NOTE: assumes unique gene indices (duplicates would sum here, whereas the
    # torch scatter is last-write-wins).
    w1p = jnp.zeros((Np, Hp), jnp.float32).at[:N, :H].set(w1.astype(jnp.float32))
    b1p = jnp.zeros((1, Hp), jnp.float32).at[0, :H].set(b1.astype(jnp.float32))
    w2s = (jnp.zeros((Hp, Np), jnp.float32)
           .at[:H, gene_ixs].set(scale * w2.astype(jnp.float32)))
    b2s = (jnp.zeros((1, Np), jnp.float32)
           .at[0, gene_ixs].set(scale * b2.astype(jnp.float32)))
    w1p = w1p.astype(compute_dtype)
    w2s_c = w2s.astype(compute_dtype)
    w_item = jnp.dtype(compute_dtype).itemsize

    def _tiling(batch):
        # Balanced batch tiles: enough tiles to respect tb_max, >=2 tiles when
        # the batch allows (v7x megacore), sublane-aligned tile height, and no
        # ~2x padding blow-up for awkward batch sizes.
        n_tiles = max(1, _cdiv(batch, tb_max))
        if batch >= 2 * _SUBLANE:
            n_tiles = max(n_tiles, 2)
        tb = _round_up(_cdiv(batch, n_tiles), _SUBLANE)
        bp = _round_up(batch, tb)
        return tb, bp

    def _vmem_limit(tb, x_item):
        w_bytes = 2 * (w_item * 2 * Np * Hp + 4 * (Hp + Np))  # conservatively 2-buffered
        io_bytes = 2 * tb * Np * (x_item + 4)                 # x in + f32 out, 2-buffered
        work = 4 * tb * (2 * Np + Hp)                         # state / hidden / dxdt
        est = w_bytes + io_bytes + work + (2 << 20)
        return int(min(60 << 20, max(est, 8 << 20)))          # stay under v7x's 64 MiB

    @jax.jit
    def forward(t, x):
        del t  # SWE is None -> t unused
        B = x.shape[0]
        TB, Bp = _tiling(B)
        xp = (jnp.zeros((Bp, Np), compute_dtype)
              .at[:B, :N].set(x.astype(compute_dtype)))

        const = lambda shape: pl.BlockSpec(shape, lambda i: (0, 0))
        dxdtp = pl.pallas_call(
            _rhs_kernel(compute_dtype),
            out_shape=jax.ShapeDtypeStruct((Bp, Np), jnp.float32),
            grid=(Bp // TB,),
            in_specs=[
                pl.BlockSpec((TB, Np), lambda i: (i, 0)),  # x: batch-tiled
                const((Np, Hp)),                           # W1 (VMEM-resident)
                const((1, Hp)),                            # b1
                const((Hp, Np)),                           # W2s (scale+scatter folded)
                const((1, Np)),                            # b2s
            ],
            out_specs=pl.BlockSpec((TB, Np), lambda i: (i, 0)),
            compiler_params=pltpu.CompilerParams(
                dimension_semantics=("parallel",),
                vmem_limit_bytes=_vmem_limit(TB, w_item),
            ),
        )(xp, w1p, b1p, w2s_c, b2s)
        return dxdtp[:B, :N].astype(x.dtype)

    @functools.partial(jax.jit, static_argnums=(1, 2))
    def euler_solve(x0, dt, n_steps):
        B = x0.shape[0]
        TB, Bp = _tiling(B)
        x0p = jnp.zeros((Bp, Np), jnp.float32).at[:B, :N].set(x0.astype(jnp.float32))
        # dt folded into the (already scale/scatter-folded) layer-2 weights.
        w2d = (float(dt) * w2s).astype(compute_dtype)
        b2d = float(dt) * b2s

        const = lambda shape: pl.BlockSpec(shape, lambda i: (0, 0))
        xTp = pl.pallas_call(
            _euler_kernel(int(n_steps), compute_dtype),
            out_shape=jax.ShapeDtypeStruct((Bp, Np), jnp.float32),
            grid=(Bp // TB,),
            in_specs=[
                pl.BlockSpec((TB, Np), lambda i: (i, 0)),  # x0: batch-tiled
                const((Np, Hp)),
                const((1, Hp)),
                const((Hp, Np)),
                const((1, Np)),
            ],
            out_specs=pl.BlockSpec((TB, Np), lambda i: (i, 0)),
            compiler_params=pltpu.CompilerParams(
                dimension_semantics=("parallel",),
                vmem_limit_bytes=_vmem_limit(TB, 4),
            ),
        )(x0p, w1p, b1p, w2d, b2d)
        return xTp[:B, :N].astype(x0.dtype)

    return forward, euler_solve


# ---------------------------------------------------------------------------
# Pure-JAX references
# ---------------------------------------------------------------------------
def _reference_rhs(x, params, gene_ixs, scale):
    w1, b1, w2, b2 = params
    out = (jnp.tanh(x @ w1 + b1) @ w2 + b2) * scale
    return jnp.zeros_like(x).at[:, gene_ixs].set(out)


def _reference_euler(x0, params, gene_ixs, scale, dt, n_steps):
    x = x0
    for _ in range(n_steps):
        x = x + dt * _reference_rhs(x, params, gene_ixs, scale)
    return x


if __name__ == "__main__":
    key = jax.random.PRNGKey(0)

    # Input names: 10 gene inputs, 6 non-gene (e.g. DRUG__) inputs.
    input_names = (
        [f"GENE__{i}" for i in range(5)]
        + [f"DRUG__{i}" for i in range(3)]
        + [f"GENE__{i}" for i in range(5, 10)]
        + [f"DRUG__{i}" for i in range(3, 6)]
    )
    gene_ixs = jnp.array(
        [i for i, name in enumerate(input_names) if name.startswith("GENE__")],
        dtype=jnp.int32,
    )

    B = 4                 # batch
    N = len(input_names)  # 16 state variables
    H = 32                # hidden width of the synthetic wrapped model
    G = int(gene_ixs.shape[0])  # 10 gene outputs
    scale = 0.5

    k1, k2, k3, k4, k5 = jax.random.split(key, 5)
    w1 = 0.1 * jax.random.normal(k1, (N, H), jnp.float32)
    b1 = 0.1 * jax.random.normal(k2, (H,), jnp.float32)
    w2 = 0.1 * jax.random.normal(k3, (H, G), jnp.float32)
    b2 = 0.1 * jax.random.normal(k4, (G,), jnp.float32)
    params = (w1, b1, w2, b2)

    x = jax.random.normal(k5, (B, N), jnp.float32)
    t = jnp.float32(0.3)  # unused (SWE=None)

    forward, euler_solve = make_odefunc(params, gene_ixs, N, scale=scale)

    # --- single forward (module semantics) -----------------------------------
    dxdt = jax.block_until_ready(forward(t, x))
    ref = _reference_rhs(x, params, gene_ixs, scale)
    assert dxdt.shape == x.shape and dxdt.dtype == x.dtype
    assert jnp.allclose(dxdt, ref, atol=1e-4, rtol=1e-4), \
        float(jnp.abs(dxdt - ref).max())

    # --- fused multi-step Euler solve (one kernel launch, in-kernel loop) ----
    dt, n_steps = 0.05, 16
    xT = jax.block_until_ready(euler_solve(x, dt, n_steps))
    xT_ref = _reference_euler(x, params, gene_ixs, scale, dt, n_steps)
    assert xT.shape == x.shape
    assert jnp.allclose(xT, xT_ref, atol=1e-3, rtol=1e-3), \
        float(jnp.abs(xT - xT_ref).max())

    # --- bf16 compute path (native MXU path; intended for production sizes) --
    fwd_bf16, _ = make_odefunc(params, gene_ixs, N, scale=scale,
                               compute_dtype=jnp.bfloat16)
    dxdt_bf16 = jax.block_until_ready(fwd_bf16(t, x))
    assert jnp.allclose(dxdt_bf16, ref, atol=5e-2, rtol=0.0), \
        float(jnp.abs(dxdt_bf16 - ref).max())

    print("KERNEL_OK")
</pallas_src>

<mosaic_0001>
module attributes {stable_mosaic.version = 11 : i64} {
  func.func @kernel(%arg0: i32, %arg1: memref<8x128xf32, #tpu.memory_space<vmem>>, %arg2: memref<128x128xf32, #tpu.memory_space<vmem>>, %arg3: memref<1x128xf32, #tpu.memory_space<vmem>>, %arg4: memref<128x128xf32, #tpu.memory_space<vmem>>, %arg5: memref<1x128xf32, #tpu.memory_space<vmem>>, %arg6: memref<8x128xf32, #tpu.memory_space<vmem>>) attributes {dimension_semantics = [#tpu.dimension_semantics<parallel>], iteration_bounds = array<i64: 1>, scalar_prefetch = 0 : i64, scratch_operands = 0 : i64, tpu.core_type = #tpu.core_type<tc>, window_params = [{transform_indices = @transform_0, window_bounds = array<i64: 8, 128>}, {pipeline_mode = #tpu.pipeline_mode<synchronous>, transform_indices = @transform_1, window_bounds = array<i64: 128, 128>}, {pipeline_mode = #tpu.pipeline_mode<synchronous>, transform_indices = @transform_2, window_bounds = array<i64: 1, 128>}, {pipeline_mode = #tpu.pipeline_mode<synchronous>, transform_indices = @transform_3, window_bounds = array<i64: 128, 128>}, {pipeline_mode = #tpu.pipeline_mode<synchronous>, transform_indices = @transform_4, window_bounds = array<i64: 1, 128>}, {transform_indices = @transform_5, window_bounds = array<i64: 8, 128>}]} {
    %c0 = arith.constant 0 : index
    %c0_0 = arith.constant 0 : index
    %0 = vector.load %arg1[%c0, %c0_0] : memref<8x128xf32, #tpu.memory_space<vmem>>, vector<8x128xf32>
    %c0_1 = arith.constant 0 : index
    %c0_2 = arith.constant 0 : index
    %1 = vector.load %arg2[%c0_1, %c0_2] : memref<128x128xf32, #tpu.memory_space<vmem>>, vector<128x128xf32>
    %cst = arith.constant dense<0.000000e+00> : vector<8x128xf32>
    %2 = tpu.matmul %0, %1, %cst {dimension_numbers = #tpu.dot_dimension_numbers<[1], [0], [0], [1], [0, 0, 1, 1], [], []>} : vector<8x128xf32>, vector<128x128xf32>, vector<8x128xf32> -> vector<8x128xf32>
    %c0_3 = arith.constant 0 : index
    %c0_4 = arith.constant 0 : index
    %3 = vector.load %arg3[%c0_3, %c0_4] : memref<1x128xf32, #tpu.memory_space<vmem>>, vector<1x128xf32>
    %4 = vector.broadcast %3 : vector<1x128xf32> to vector<8x128xf32>
    %5 = arith.addf %2, %4 : vector<8x128xf32>
    %6 = math.tanh %5 : vector<8x128xf32>
    %c0_5 = arith.constant 0 : index
    %c0_6 = arith.constant 0 : index
    %7 = vector.load %arg4[%c0_5, %c0_6] : memref<128x128xf32, #tpu.memory_space<vmem>>, vector<128x128xf32>
    %cst_7 = arith.constant dense<0.000000e+00> : vector<8x128xf32>
    %8 = tpu.matmul %6, %7, %cst_7 {dimension_numbers = #tpu.dot_dimension_numbers<[1], [0], [0], [1], [0, 0, 1, 1], [], []>} : vector<8x128xf32>, vector<128x128xf32>, vector<8x128xf32> -> vector<8x128xf32>
    %c0_8 = arith.constant 0 : index
    %c0_9 = arith.constant 0 : index
    %9 = vector.load %arg5[%c0_8, %c0_9] : memref<1x128xf32, #tpu.memory_space<vmem>>, vector<1x128xf32>
    %10 = vector.broadcast %9 : vector<1x128xf32> to vector<8x128xf32>
    %11 = arith.addf %8, %10 : vector<8x128xf32>
    %c0_10 = arith.constant 0 : index
    %c0_11 = arith.constant 0 : index
    %12 = vector.load %arg6[%c0_10, %c0_11] : memref<8x128xf32, #tpu.memory_space<vmem>>, vector<8x128xf32>
    tpu.vector_store %arg6[%c0_10, %c0_11], %11 {strides = array<i32>} : memref<8x128xf32, #tpu.memory_space<vmem>>, vector<8x128xf32>,
    return
  }
  func.func @transform_0(%arg0: i32) -> (i32, i32) {
    %c0_i32 = arith.constant 0 : i32
    %c0_i32_0 = arith.constant 0 : i32
    return %arg0, %c0_i32 : i32, i32
  }
  func.func @transform_1(%arg0: i32) -> (i32, i32) {
    %c0_i32 = arith.constant 0 : i32
    %c0_i32_0 = arith.constant 0 : i32
    %c0_i32_1 = arith.constant 0 : i32
    return %c0_i32, %c0_i32_0 : i32, i32
  }
  func.func @transform_2(%arg0: i32) -> (i32, i32) {
    %c0_i32 = arith.constant 0 : i32
    %c0_i32_0 = arith.constant 0 : i32
    %c0_i32_1 = arith.constant 0 : i32
    return %c0_i32, %c0_i32_0 : i32, i32
  }
  func.func @transform_3(%arg0: i32) -> (i32, i32) {
    %c0_i32 = arith.constant 0 : i32
    %c0_i32_0 = arith.constant 0 : i32
    %c0_i32_1 = arith.constant 0 : i32
    return %c0_i32, %c0_i32_0 : i32, i32
  }
  func.func @transform_4(%arg0: i32) -> (i32, i32) {
    %c0_i32 = arith.constant 0 : i32
    %c0_i32_0 = arith.constant 0 : i32
    %c0_i32_1 = arith.constant 0 : i32
    return %c0_i32, %c0_i32_0 : i32, i32
  }
  func.func @transform_5(%arg0: i32) -> (i32, i32) {
    %c0_i32 = arith.constant 0 : i32
    %c0_i32_0 = arith.constant 0 : i32
    return %arg0, %c0_i32 : i32, i32
  }
}

</mosaic_0001>

<llo_original>
// kernel: forward.1
$region0: #{forward.1}
  #allocation0 [shape = 'u32[]', space=smem, size = 0x4, offset = 0x4, fixed_abs, tag = 'smem constant byte address 0x4 - core index']
  #allocation1 [shape = 'u32[144,128]{1,0:T(1,128)}', space=vmem, size = 0x12000, scoped, tag = 'internal scratch']
  %s0 = inlined_call_operand.vmem [shape: f32[8,128], index: 0, kind: input, shape index: {}]
  %s1 = inlined_call_operand.hbm [shape: f32[128,128], index: 1, kind: input, shape index: {}]
  %s2 = inlined_call_operand.vmem [shape: f32[1,128], index: 2, kind: input, shape index: {}]
  %s3 = inlined_call_operand.hbm [shape: f32[128,128], index: 3, kind: input, shape index: {}]
  %s4 = inlined_call_operand.vmem [shape: f32[1,128], index: 4, kind: input, shape index: {}]
  %s5 = inlined_call_operand.vmem [shape: f32[8,128], index: 5, kind: output, shape index: {}]
  %s6 = sld [smem:[#allocation0]]
  $region38: #{forward.1} parent=0
    _
  %s8 = ssub.s32 1, %s6
  %s9 = scalar_select 0, %s8, %s6
  $region1: #{forward.1} parent=0
    #allocation2 [shape = 'u8[65536]{0}', space=vmem, size = 0x10000, scoped, tag = 'input window, operand 1, single buffered']
    #allocation3 [shape = 's32[1]{0}', space=sflag, size = 0x4, scoped, tag = 'scoped memory for forward.1']
    #allocation4 [shape = 'u8[65536]{0}', space=vmem, size = 0x10000, scoped, tag = 'input window, operand 3, single buffered']
    #allocation5 [shape = 's32[1]{0}', space=sflag, size = 0x4, scoped, tag = 'scoped memory for forward.1']
    %10 = vsyncpa [#allocation3], 0
    %11 = vsyncpa [#allocation5], 0
    // Predicated region
    $region2: #{forward.1} parent=1 // pred_check
      _
    $region3: #{forward.1} parent=1 // pred_check_branch
      %13 = sbr.rel (0) target = $region5
    $region4: #{forward.1} parent=1 // pred_region
      _
    $region5: #{forward.1} parent=1 // pred_fallthru
      _
    // Predicated region
    $region6: #{forward.1} parent=1 // pred_check
      _
    $region7: #{forward.1} parent=1 // pred_check_branch
      %15 = sbr.rel (0) target = $region9
    $region8: #{forward.1} parent=1 // pred_region
      %s17 = ssub.s32 2048, 2048
      %18 = vsyncadd [#allocation3], %s17
      %s19 = sshll.u32 [#allocation2], 4
      %s20 = int_to_ptr.vmem [resolvable:$true] %s19
      %25 = dma.hbm_to_vmem [thread:$0]  %s1, 2048, %s20, [#allocation3], 128, 128, 8
    $region9: #{forward.1} parent=1 // pred_fallthru
      _
    // Predicated region
    $region10: #{forward.1} parent=1 // pred_check
      _
    $region11: #{forward.1} parent=1 // pred_check_branch
      %27 = sbr.rel (0) target = $region13
    $region12: #{forward.1} parent=1 // pred_region
      _
    $region13: #{forward.1} parent=1 // pred_fallthru
      _
    // Predicated region
    $region14: #{forward.1} parent=1 // pred_check
      _
    $region15: #{forward.1} parent=1 // pred_check_branch
      %29 = sbr.rel (0) target = $region17
    $region16: #{forward.1} parent=1 // pred_region
      %s31 = ssub.s32 2048, 2048
      %32 = vsyncadd [#allocation5], %s31
      %s33 = sshll.u32 [#allocation4], 4
      %s34 = int_to_ptr.vmem [resolvable:$true] %s33
      %39 = dma.hbm_to_vmem [thread:$0]  %s3, 2048, %s34, [#allocation5], 128, 128, 8
    $region17: #{forward.1} parent=1 // pred_fallthru
      _
    // Predicated region
    $region18: #{forward.1} parent=1 // pred_check
      _
    $region19: #{forward.1} parent=1 // pred_check_branch
      %41 = sbr.rel (0) target = $region21
    $region20: #{forward.1} parent=1 // pred_region
      _
    $region21: #{forward.1} parent=1 // pred_fallthru
      _
    // Predicated region
    $region22: #{forward.1} parent=1 // pred_check
      _
    $region23: #{forward.1} parent=1 // pred_check_branch
      %43 = sbr.rel (0) target = $region25
    $region24: #{forward.1} parent=1 // pred_region
      %44 = dma.done [#allocation3], 2048
    $region25: #{forward.1} parent=1 // pred_fallthru
      _
    // Predicated region
    $region26: #{forward.1} parent=1 // pred_check
      _
    $region27: #{forward.1} parent=1 // pred_check_branch
      %46 = sbr.rel (0) target = $region29
    $region28: #{forward.1} parent=1 // pred_region
      %47 = dma.done [#allocation5], 2048
    $region29: #{forward.1} parent=1 // pred_fallthru
      _
    %v48 = vld [vmem:[%s0] sm:$0xff]
    %v49 = vld [vmem:[#allocation2] sm:$0xff]
    %v50 = vld [vmem:[#allocation2 + $0x8] sm:$0xff]
    %v51 = vld [vmem:[#allocation2 + $0x10] sm:$0xff]
    %v52 = vld [vmem:[#allocation2 + $0x18] sm:$0xff]
    %v53 = vld [vmem:[#allocation2 + $0x20] sm:$0xff]
    %v54 = vld [vmem:[#allocation2 + $0x28] sm:$0xff]
    %v55 = vld [vmem:[#allocation2 + $0x30] sm:$0xff]
    %v56 = vld [vmem:[#allocation2 + $0x38] sm:$0xff]
    %v57 = vld [vmem:[#allocation2 + $0x40] sm:$0xff]
    %v58 = vld [vmem:[#allocation2 + $0x48] sm:$0xff]
    %v59 = vld [vmem:[#allocation2 + $0x50] sm:$0xff]
    %v60 = vld [vmem:[#allocation2 + $0x58] sm:$0xff]
    %v61 = vld [vmem:[#allocation2 + $0x60] sm:$0xff]
    %v62 = vld [vmem:[#allocation2 + $0x68] sm:$0xff]
    %v63 = vld [vmem:[#allocation2 + $0x70] sm:$0xff]
    %v64 = vld [vmem:[#allocation2 + $0x78] sm:$0xff]
    %v65 = vld [vmem:[%s2] sm:$0x1]
    %v67 = vlaneseq
    %v68 = vshrl.u32 %v67, 7
    %v69 = vsub.s32 0, %v68
    %v70 = vrot.slane %v65, %v69
    %72 = vmatprep.subr.mxu0 0.0
    %73 = vmatpush1.msra.mxu0 %v49
    %74 = vmatprep.subr.mxu0 0.0
    %75 = vmatpush1.msra.mxu0 %v50
    %76 = vmatprep.subr.mxu0 0.0
    %77 = vmatpush1.msra.mxu0 %v51
    %78 = vmatprep.subr.mxu0 0.0
    %79 = vmatpush1.msra.mxu0 %v52
    %80 = vmatprep.subr.mxu0 0.0
    %81 = vmatpush1.msra.mxu0 %v53
    %82 = vmatprep.subr.mxu0 0.0
    %83 = vmatpush1.msra.mxu0 %v54
    %84 = vmatprep.subr.mxu0 0.0
    %85 = vmatpush1.msra.mxu0 %v55
    %86 = vmatprep.subr.mxu0 0.0
    %87 = vmatpush1.msra.mxu0 %v56
    %88 = vmatprep.subr.mxu0 0.0
    %89 = vmatpush1.msra.mxu0 %v57
    %90 = vmatprep.subr.mxu0 0.0
    %91 = vmatpush1.msra.mxu0 %v58
    %92 = vmatprep.subr.mxu0 0.0
    %93 = vmatpush1.msra.mxu0 %v59
    %94 = vmatprep.subr.mxu0 0.0
    %95 = vmatpush1.msra.mxu0 %v60
    %96 = vmatprep.subr.mxu0 0.0
    %97 = vmatpush1.msra.mxu0 %v61
    %98 = vmatprep.subr.mxu0 0.0
    %99 = vmatpush1.msra.mxu0 %v62
    %100 = vmatprep.subr.mxu0 0.0
    %101 = vmatpush1.msra.mxu0 %v63
    %102 = vmatprep.subr.mxu0 0.0
    %103 = vmatpush1.msra.mxu0 %v64
    %104 = vmatprep.subr.mxu0 0.0
    %105 = vmatpush1.msra.mxu0 0.0
    %106 = vmatprep.subr.mxu0 0.0
    %107 = vmatpush1.msra.mxu0 0.0
    %108 = vmatprep.subr.mxu0 0.0
    %109 = vmatpush1.msra.mxu0 0.0
    %110 = vmatprep.subr.mxu0 0.0
    %111 = vmatpush1.msra.mxu0 0.0
    %112 = vmatprep.subr.mxu0 0.0
    %113 = vmatpush1.msra.mxu0 0.0
    %114 = vmatprep.subr.mxu0 0.0
    %115 = vmatpush1.msra.mxu0 0.0
    %116 = vmatprep.subr.mxu0 0.0
    %117 = vmatpush1.msra.mxu0 0.0
    %118 = vmatprep.subr.mxu0 0.0
    %119 = vmatpush1.msra.mxu0 0.0
    %120 = vmatprep.subr.mxu0 0.0
    %121 = vmatpush1.msra.mxu0 0.0
    %122 = vmatprep.subr.mxu0 0.0
    %123 = vmatpush1.msra.mxu0 0.0
    %124 = vmatprep.subr.mxu0 0.0
    %125 = vmatpush1.msra.mxu0 0.0
    %126 = vmatprep.subr.mxu0 0.0
    %127 = vmatpush1.msra.mxu0 0.0
    %128 = vmatprep.subr.mxu0 0.0
    %129 = vmatpush1.msra.mxu0 0.0
    %130 = vmatprep.subr.mxu0 0.0
    %131 = vmatpush1.msra.mxu0 0.0
    %132 = vmatprep.subr.mxu0 0.0
    %133 = vmatpush1.msra.mxu0 0.0
    %134 = vmatprep.subr.mxu0 0.0
    %135 = vmatpush1.msra.mxu0 0.0
    %136 = vmatprep.mubr.f32.mxu0 0.0
    %137 = vmatmul.mubr.f32.gmra.mrb[0].mxu0 %v48
    %v138 = vpop.f32.mrb[0].mxu0
    %v139 = vadd.f32 %v70, %v138
    %v140 = vpop.f32.mrb[0].mxu0
    %141 = vdwg.mxu0
    %v142 = vtanh.pop %v139
    %v143 = vld [vmem:[#allocation4] sm:$0xff]
    %v144 = vld [vmem:[#allocation4 + $0x8] sm:$0xff]
    %v145 = vld [vmem:[#allocation4 + $0x10] sm:$0xff]
    %v146 = vld [vmem:[#allocation4 + $0x18] sm:$0xff]
    %v147 = vld [vmem:[#allocation4 + $0x20] sm:$0xff]
    %v148 = vld [vmem:[#allocation4 + $0x28] sm:$0xff]
    %v149 = vld [vmem:[#allocation4 + $0x30] sm:$0xff]
    %v150 = vld [vmem:[#allocation4 + $0x38] sm:$0xff]
    %v151 = vld [vmem:[#allocation4 + $0x40] sm:$0xff]
    %v152 = vld [vmem:[#allocation4 + $0x48] sm:$0xff]
    %v153 = vld [vmem:[#allocation4 + $0x50] sm:$0xff]
    %v154 = vld [vmem:[#allocation4 + $0x58] sm:$0xff]
    %v155 = vld [vmem:[#allocation4 + $0x60] sm:$0xff]
    %v156 = vld [vmem:[#allocation4 + $0x68] sm:$0xff]
    %v157 = vld [vmem:[#allocation4 + $0x70] sm:$0xff]
    %v158 = vld [vmem:[#allocation4 + $0x78] sm:$0xff]
    %v159 = vld [vmem:[%s4] sm:$0x1]
    %v161 = vlaneseq
    %v162 = vshrl.u32 %v161, 7
    %v163 = vsub.s32 0, %v162
    %v164 = vrot.slane %v159, %v163
    %166 = vmatprep.subr.mxu0 0.0
    %167 = vmatpush1.msra.mxu0 %v143
    %168 = vmatprep.subr.mxu0 0.0
    %169 = vmatpush1.msra.mxu0 %v144
    %170 = vmatprep.subr.mxu0 0.0
    %171 = vmatpush1.msra.mxu0 %v145
    %172 = vmatprep.subr.mxu0 0.0
    %173 = vmatpush1.msra.mxu0 %v146
    %174 = vmatprep.subr.mxu0 0.0
    %175 = vmatpush1.msra.mxu0 %v147
    %176 = vmatprep.subr.mxu0 0.0
    %177 = vmatpush1.msra.mxu0 %v148
    %178 = vmatprep.subr.mxu0 0.0
    %179 = vmatpush1.msra.mxu0 %v149
    %180 = vmatprep.subr.mxu0 0.0
    %181 = vmatpush1.msra.mxu0 %v150
    %182 = vmatprep.subr.mxu0 0.0
    %183 = vmatpush1.msra.mxu0 %v151
    %184 = vmatprep.subr.mxu0 0.0
    %185 = vmatpush1.msra.mxu0 %v152
    %186 = vmatprep.subr.mxu0 0.0
    %187 = vmatpush1.msra.mxu0 %v153
    %188 = vmatprep.subr.mxu0 0.0
    %189 = vmatpush1.msra.mxu0 %v154
    %190 = vmatprep.subr.mxu0 0.0
    %191 = vmatpush1.msra.mxu0 %v155
    %192 = vmatprep.subr.mxu0 0.0
    %193 = vmatpush1.msra.mxu0 %v156
    %194 = vmatprep.subr.mxu0 0.0
    %195 = vmatpush1.msra.mxu0 %v157
    %196 = vmatprep.subr.mxu0 0.0
    %197 = vmatpush1.msra.mxu0 %v158
    %198 = vmatprep.subr.mxu0 0.0
    %199 = vmatpush1.msra.mxu0 0.0
    %200 = vmatprep.subr.mxu0 0.0
    %201 = vmatpush1.msra.mxu0 0.0
    %202 = vmatprep.subr.mxu0 0.0
    %203 = vmatpush1.msra.mxu0 0.0
    %204 = vmatprep.subr.mxu0 0.0
    %205 = vmatpush1.msra.mxu0 0.0
    %206 = vmatprep.subr.mxu0 0.0
    %207 = vmatpush1.msra.mxu0 0.0
    %208 = vmatprep.subr.mxu0 0.0
    %209 = vmatpush1.msra.mxu0 0.0
    %210 = vmatprep.subr.mxu0 0.0
    %211 = vmatpush1.msra.mxu0 0.0
    %212 = vmatprep.subr.mxu0 0.0
    %213 = vmatpush1.msra.mxu0 0.0
    %214 = vmatprep.subr.mxu0 0.0
    %215 = vmatpush1.msra.mxu0 0.0
    %216 = vmatprep.subr.mxu0 0.0
    %217 = vmatpush1.msra.mxu0 0.0
    %218 = vmatprep.subr.mxu0 0.0
    %219 = vmatpush1.msra.mxu0 0.0
    %220 = vmatprep.subr.mxu0 0.0
    %221 = vmatpush1.msra.mxu0 0.0
    %222 = vmatprep.subr.mxu0 0.0
    %223 = vmatpush1.msra.mxu0 0.0
    %224 = vmatprep.subr.mxu0 0.0
    %225 = vmatpush1.msra.mxu0 0.0
    %226 = vmatprep.subr.mxu0 0.0
    %227 = vmatpush1.msra.mxu0 0.0
    %228 = vmatprep.subr.mxu0 0.0
    %229 = vmatpush1.msra.mxu0 0.0
    %230 = vmatprep.mubr.f32.mxu0 0.0
    %231 = vmatmul.mubr.f32.gmra.mrb[0].mxu0 %v142
    %v232 = vpop.f32.mrb[0].mxu0
    %v233 = vadd.f32 %v164, %v232
    %v234 = vpop.f32.mrb[0].mxu0
    %235 = vdwg.mxu0
    %236 = vst [vmem:[%s5] sm:$0xff] %v233
    // Predicated region
    $region30: #{forward.1} parent=1 // pred_check
      _
    $region31: #{forward.1} parent=1 // pred_check_branch
      %238 = sbr.rel (0) target = $region33
    $region32: #{forward.1} parent=1 // pred_region
      _
    $region33: #{forward.1} parent=1 // pred_fallthru
      _
    // Predicated region
    $region34: #{forward.1} parent=1 // pred_check
      _
    $region35: #{forward.1} parent=1 // pred_check_branch
      %240 = sbr.rel (0) target = $region37
    $region36: #{forward.1} parent=1 // pred_region
      _
    $region37: #{forward.1} parent=1 // pred_fallthru
      _
    %241 = vsyncpa [#allocation3], 1
    %242 = vsyncpa [#allocation5], 1

</llo_original>
